<compile_context>
chip_gen: v5e
topology: v5e:2x2
jax: 0.10.0
libtpu: 0.0.40
codegen_flags: <defaults>
</compile_context>

<pallas_src>
import numpy as np
import jax
import jax.numpy as jnp
from jax import lax
from jax.experimental import pallas as pl
from jax.experimental.pallas import tpu as pltpu


# --------------------------- parameter initialization ----------------------- #

def init_params(key):
    """Raw parameters in PyTorch layouts (Conv2d: OIHW, ConvTranspose2d: IOHW)."""
    ks = jax.random.split(key, 8)

    def w(k, shape, scale=0.1):
        return (scale * jax.random.normal(k, shape)).astype(jnp.float32)

    return {
        "conv1_w": w(ks[0], (16, 3, 3, 3)),    # nn.Conv2d(3, 16, 3, stride=2, padding=1)
        "conv1_b": w(ks[1], (16,), 0.01),
        "deconv1_w": w(ks[2], (16, 8, 3, 3)),  # nn.ConvTranspose2d(16, 8, 3, 2, 1, output_padding=1)
        "deconv1_b": w(ks[3], (8,), 0.01),
        "conv2_w": w(ks[4], (16, 8, 3, 3)),    # nn.Conv2d(8, 16, 3, stride=2, padding=1)
        "conv2_b": w(ks[5], (16,), 0.01),
        "deconv2_w": w(ks[6], (16, 8, 3, 3)),  # nn.ConvTranspose2d(16, 8, 3, 2, 1, output_padding=1)
        "deconv2_b": w(ks[7], (8,), 0.01),
    }


# ------------------ one-time operator construction (host side) -------------- #
# Activations are held per image as (H, W*C) with (W, C) on lanes.  The W/C part
# of every (de)conv is folded into a dense per-H-tap operator A_kh of shape
# (Wi*Cin, Wo*Cout); the H part becomes even/odd row bookkeeping in the kernel.

def _conv_w_op(w_oihw, wi, stride, pad):
    """Per-tap W/C operator for nn.Conv2d(kernel=3): A[kh][(wi,ci),(wo,co)] = W[co,ci,kh,kw]."""
    w = np.asarray(w_oihw, np.float32)
    cout, cin, k, _ = w.shape
    wo = (wi + 2 * pad - k) // stride + 1
    A = np.zeros((k, wi * cin, wo * cout), np.float32)
    for kh in range(k):
        for o in range(wo):
            for kw in range(k):
                i = stride * o + kw - pad
                if 0 <= i < wi:
                    A[kh, i * cin:(i + 1) * cin, o * cout:(o + 1) * cout] = w[:, :, kh, kw].T
    return A, wo, cout


def _deconv_w_op(w_iohw, wi, stride, pad, opad):
    """Per-tap W/C operator for nn.ConvTranspose2d(kernel=3): wo = s*wi + kw - pad."""
    w = np.asarray(w_iohw, np.float32)
    cin, cout, k, _ = w.shape
    wo = (wi - 1) * stride - 2 * pad + k + opad
    A = np.zeros((k, wi * cin, wo * cout), np.float32)
    for kh in range(k):
        for i in range(wi):
            for kw in range(k):
                o = stride * i + kw - pad
                if 0 <= o < wo:
                    A[kh, i * cin:(i + 1) * cin, o * cout:(o + 1) * cout] = w[:, :, kh, kw]
    return A, wo, cout


def prepare_operators(params, h=16, w=16, compute_dtype=jnp.bfloat16):
    """All weight transforms happen once here; the kernel only sees packed operators.

    Packed layout (review item: collapse 13 operands into a few arrays):
      w_conv   (144 + 384, 128)  : conv1/conv2 taps K-concatenated (tap order: row-1, row, row+1)
      w_deconv (256 + 256, 256)  : deconv1/deconv2 as ONE merged [even | odd] operator
                                     [[B_kh1 | B_kh2], [0 | B_kh0]] acting on [act | act_up]
      bias     (4, 256) f32      : one bias row per layer (conv rows use lanes [:128])
    """
    A1, w1, c1 = _conv_w_op(params["conv1_w"], w, stride=2, pad=1)
    h1 = (h + 2 - 3) // 2 + 1
    B1, w2, c2 = _deconv_w_op(params["deconv1_w"], w1, stride=2, pad=1, opad=1)
    h2 = (h1 - 1) * 2 - 2 + 3 + 1
    A2, w3, c3 = _conv_w_op(params["conv2_w"], w2, stride=2, pad=1)
    h3 = (h2 + 2 - 3) // 2 + 1
    B2, w4, c4 = _deconv_w_op(params["deconv2_w"], w3, stride=2, pad=1, opad=1)
    h4 = (h3 - 1) * 2 - 2 + 3 + 1

    ne = w2 * c2                                   # 128: lanes of one output-parity half
    assert w1 * c1 == ne and w3 * c3 == ne and w4 * c4 == ne
    assert h1 == h3 and (h1 & (h1 - 1)) == 0       # per-image row blocks (8), power of two
    assert h2 == 2 * h1 and h4 == 2 * h3

    w_conv = np.concatenate(
        [np.concatenate([A1[0], A1[1], A1[2]], axis=0),    # conv1: K = 3*Wi*Cin = 144
         np.concatenate([A2[0], A2[1], A2[2]], axis=0)],   # conv2: K = 3*Wi*Cin = 384
        axis=0)

    def merged_deconv(B):
        # [act | act_up] @ [[B1, B2], [0, B0]] = [even rows | odd rows]  (N = 256)
        kk, nn = B.shape[1], B.shape[2]
        m = np.zeros((2 * kk, 2 * nn), np.float32)
        m[:kk, :nn] = B[1]        # even output rows  <- act        (kh = 1)
        m[:kk, nn:] = B[2]        # odd  output rows  <- act        (kh = 2)
        m[kk:, nn:] = B[0]        # odd  output rows  <- act row+1  (kh = 0)
        return m

    w_deconv = np.concatenate([merged_deconv(B1), merged_deconv(B2)], axis=0)

    biases = np.zeros((4, 2 * ne), np.float32)
    biases[0, :w1 * c1] = np.tile(np.asarray(params["conv1_b"], np.float32), w1)
    biases[1, :] = np.tile(np.asarray(params["deconv1_b"], np.float32), 2 * w2)
    biases[2, :w3 * c3] = np.tile(np.asarray(params["conv2_b"], np.float32), w3)
    biases[3, :] = np.tile(np.asarray(params["deconv2_b"], np.float32), 2 * w4)

    return {
        "w_conv": jnp.asarray(w_conv, dtype=compute_dtype),
        "w_deconv": jnp.asarray(w_deconv, dtype=compute_dtype),
        "bias": jnp.asarray(biases, dtype=jnp.float32),
        "rows_per_img": h1,              # 8 rows per image at every kernel stage
        "lane_half": ne,                 # 128
        "out_hwc": (h4, w4, c4),         # (16, 16, 8)
    }


# -------------------------------- Pallas kernel ------------------------------ #

def _make_kernel(rows_per_img, compute_dtype):
    """Kernel for one grid step: `bs` images stacked along the M (row) axis."""
    assert rows_per_img & (rows_per_img - 1) == 0

    def kernel(x_ref, wc_ref, wd_ref, b_ref, o_ref, sh_ref):
        R = x_ref.shape[0]                      # bs * rows_per_img stacked rows
        NE = wd_ref.shape[1] // 2               # lanes of one output-parity half (128)
        k1 = x_ref.shape[1]                     # conv1 K (= 3 * Wi * Cin)
        OFF = 8                                 # sublane-aligned store offset in the scratch

        # Image-boundary masks along the stacked M axis.
        rid = lax.broadcasted_iota(jnp.int32, (R, NE), 0) & (rows_per_img - 1)
        first_row = rid == 0
        last_row = rid == rows_per_img - 1

        # Per-image row shifts: one aligned store + one offset load (ld/st slots)
        # + a VPU select.  This replaces every 0/1 "S" row-selection matmul.
        def shift_down(v):                      # out[i] = v[i-1], zero on each image's first row
            sh_ref[OFF:OFF + R, :] = v
            return jnp.where(first_row, 0.0, sh_ref[OFF - 1:OFF - 1 + R, :])

        def shift_up(v):                        # out[i] = v[i+1], zero on each image's last row
            sh_ref[OFF:OFF + R, :] = v
            return jnp.where(last_row, 0.0, sh_ref[OFF + 1:OFF + 1 + R, :])

        def conv(taps, ws, we, brow):           # K-concatenated taps -> ONE matmul, N = 128
            return (jnp.dot(taps, wc_ref[ws:we, :], preferred_element_type=jnp.float32)
                    + b_ref[brow:brow + 1, :NE])

        def deconv(act, ws, we, brow):          # A-first; [even | odd] merged -> ONE matmul, N = 256
            lhs = jnp.concatenate([act.astype(compute_dtype),
                                   shift_up(act).astype(compute_dtype)], axis=1)
            return (jnp.dot(lhs, wd_ref[ws:we, :], preferred_element_type=jnp.float32)
                    + b_ref[brow:brow + 1, :])

        # conv1: the three H-taps were gathered & lane-concatenated by the wrapper.
        y1 = conv(x_ref[...], 0, k1, 0)                              # (R, 128) f32
        # deconv1: output rows split by parity -> [even | odd] on lanes.
        eo1 = deconv(y1, 0, 2 * NE, 1)                               # (R, 256) f32
        e1, o1 = eo1[:, :NE], eo1[:, NE:]
        # conv2: H-taps of the (virtually interleaved) deconv1 output are exactly
        #        [shift_down(odd) | even | odd]  -> ONE K = 384 matmul.
        taps2 = jnp.concatenate([shift_down(o1), e1, o1], axis=1).astype(compute_dtype)
        y2 = conv(taps2, k1, wc_ref.shape[0], 2)                     # (R, 128) f32
        # deconv2: final output stays in [even | odd] lane layout (wrapper interleaves).
        o_ref[...] = deconv(y2, 2 * NE, 4 * NE, 3)                   # (R, 256) f32

    return kernel


def net_tran_forward(ops, x_nchw, images_per_step=None):
    n, c, h, w = x_nchw.shape
    rows = ops["rows_per_img"]                 # 8 rows per image at every kernel stage
    ne = ops["lane_half"]                      # 128
    ho, wo, co = ops["out_hwc"]
    cdt = ops["w_conv"].dtype

    # ---- layout plumbing only (fuses with the NCHW transpose in XLA): split input
    #      rows by parity and lane-concatenate conv1's three H-taps so the first
    #      layer is a single matmul inside the kernel.
    xr = jnp.transpose(x_nchw, (0, 2, 3, 1)).reshape(n, h, w * c)
    xe = xr[:, 0::2, :]                                              # rows 2o
    xo = xr[:, 1::2, :]                                              # rows 2o+1
    xm = jnp.concatenate([jnp.zeros_like(xo[:, :1]), xo[:, :-1]], axis=1)  # rows 2o-1 (zero top)
    x_taps = jnp.concatenate([xm, xe, xo], axis=2).reshape(n * rows, 3 * w * c).astype(cdt)

    # ---- per-step batching: stack `bs` images along M (fills the MXU row dim and
    #      amortizes the ~600-cycle grid-step overhead).  batch=2 -> bs=2, grid=(1,).
    #      For large batches the grid stays >1 and "parallel" shards it across TCs.
    if images_per_step is None:
        target = max(1, 128 // rows)
        images_per_step = max(d for d in range(1, min(n, target) + 1) if n % d == 0)
    bs = images_per_step
    assert n % bs == 0
    R = bs * rows

    out = pl.pallas_call(
        _make_kernel(rows, cdt),
        out_shape=jax.ShapeDtypeStruct((n * rows, 2 * ne), jnp.float32),
        grid_spec=pltpu.PrefetchScalarGridSpec(
            num_scalar_prefetch=0,
            grid=(n // bs,),
            in_specs=[
                pl.BlockSpec((R, 3 * w * c), lambda i: (i, 0)),        # per-step image block
                pl.BlockSpec(ops["w_conv"].shape, lambda i: (0, 0)),   # resident conv operators
                pl.BlockSpec(ops["w_deconv"].shape, lambda i: (0, 0)), # resident deconv operators
                pl.BlockSpec(ops["bias"].shape, lambda i: (0, 0)),     # resident bias rows
            ],
            out_specs=pl.BlockSpec((R, 2 * ne), lambda i: (i, 0)),     # lane-dense, 256 wide
            scratch_shapes=[pltpu.VMEM((R + 16, ne), jnp.float32)],    # row-shift scratch
        ),
        compiler_params=pltpu.CompilerParams(
            dimension_semantics=("parallel",),
        ),
    )(x_taps, ops["w_conv"], ops["w_deconv"], ops["bias"])

    # (N*rows, [even|odd]*Wo*Co) -> NHWC: output row h = 2*i + parity -> NCHW.
    out = out.reshape(n, ho, wo, co)
    return out.transpose(0, 3, 1, 2)


# ----------------------------- pure-JAX reference ---------------------------- #

def _ref_forward(params, x_nchw):
    dn = ("NHWC", "HWIO", "NHWC")
    x = jnp.transpose(x_nchw, (0, 2, 3, 1))

    def conv(y, w_oihw, b, stride, pad):
        w_hwio = jnp.transpose(w_oihw, (2, 3, 1, 0))
        y = lax.conv_general_dilated(y, w_hwio, (stride, stride),
                                     ((pad, pad), (pad, pad)),
                                     dimension_numbers=dn)
        return y + b

    def deconv(y, w_iohw, b, stride, pad, opad):
        k = w_iohw.shape[-1]
        w_eq = jnp.flip(w_iohw, axis=(2, 3)).transpose(2, 3, 0, 1)
        lo, hi = k - 1 - pad, k - 1 - pad + opad
        y = lax.conv_general_dilated(y, w_eq, (1, 1), ((lo, hi), (lo, hi)),
                                     lhs_dilation=(stride, stride),
                                     dimension_numbers=dn)
        return y + b

    out = conv(x, params["conv1_w"], params["conv1_b"], 2, 1)
    out = deconv(out, params["deconv1_w"], params["deconv1_b"], 2, 1, 1)
    out = conv(out, params["conv2_w"], params["conv2_b"], 2, 1)
    out = deconv(out, params["deconv2_w"], params["deconv2_b"], 2, 1, 1)
    return jnp.transpose(out, (0, 3, 1, 2))


# ------------------------------------ main ----------------------------------- #

if __name__ == "__main__":
    key = jax.random.PRNGKey(0)
    pkey, xkey = jax.random.split(key)
    params = init_params(pkey)

    # nn.Conv2d(3, ...) implies 3 input channels; small NCHW input.
    x = jax.random.normal(xkey, (2, 3, 16, 16), dtype=jnp.float32)

    ref = jax.block_until_ready(_ref_forward(params, x))

    # (a) f32-operand path: verifies the restructured single-kernel math tightly.
    ops32 = prepare_operators(params, h=16, w=16, compute_dtype=jnp.float32)
    out32 = jax.block_until_ready(jax.jit(lambda xx: net_tran_forward(ops32, xx))(x))
    assert out32.shape == (2, 8, 16, 16), out32.shape
    err32 = float(jnp.max(jnp.abs(out32 - ref)))
    assert jnp.allclose(out32, ref, rtol=1e-3, atol=1e-3), err32

    # (b) bf16 MXU-operand fast path (f32 accumulation) per the perf review; operand
    #     rounding across the 4 chained layers needs a looser (but still tight) tolerance.
    ops16 = prepare_operators(params, h=16, w=16, compute_dtype=jnp.bfloat16)
    out16 = jax.block_until_ready(jax.jit(lambda xx: net_tran_forward(ops16, xx))(x))
    assert out16.shape == (2, 8, 16, 16), out16.shape
    err16 = float(jnp.max(jnp.abs(out16 - ref)))
    assert jnp.allclose(out16, ref, rtol=3e-2, atol=3e-2), err16

    print("KERNEL_OK")
</pallas_src>

<mosaic_0001>
module attributes {stable_mosaic.version = 11 : i64} {
  func.func @kernel(%arg0: i32, %arg1: memref<16x144xf32, #tpu.memory_space<vmem>>, %arg2: memref<528x128xf32, #tpu.memory_space<vmem>>, %arg3: memref<512x256xf32, #tpu.memory_space<vmem>>, %arg4: memref<4x256xf32, #tpu.memory_space<vmem>>, %arg5: memref<16x256xf32, #tpu.memory_space<vmem>>, %arg6: memref<32x128xf32, #tpu.memory_space<vmem>>) attributes {dimension_semantics = [#tpu.dimension_semantics<parallel>], iteration_bounds = array<i64: 1>, scalar_prefetch = 0 : i64, scratch_operands = 1 : i64, tpu.core_type = #tpu.core_type<tc>, window_params = [{transform_indices = @transform_0, window_bounds = array<i64: 16, 144>}, {pipeline_mode = #tpu.pipeline_mode<synchronous>, transform_indices = @transform_1, window_bounds = array<i64: 528, 128>}, {pipeline_mode = #tpu.pipeline_mode<synchronous>, transform_indices = @transform_2, window_bounds = array<i64: 512, 256>}, {pipeline_mode = #tpu.pipeline_mode<synchronous>, transform_indices = @transform_3, window_bounds = array<i64: 4, 256>}, {transform_indices = @transform_4, window_bounds = array<i64: 16, 256>}]} {
    %0 = tpu.iota {dimensions = array<i32: 0>} : vector<16x128xi32>
    %c7_i32 = arith.constant 7 : i32
    %1 = vector.broadcast %c7_i32 : i32 to vector<16x128xi32>
    %2 = arith.andi %0, %1 : vector<16x128xi32>
    %c0_i32 = arith.constant 0 : i32
    %3 = vector.broadcast %c0_i32 : i32 to vector<16x128xi32>
    %4 = arith.cmpi eq, %2, %3 : vector<16x128xi32>
    %c7_i32_0 = arith.constant 7 : i32
    %5 = vector.broadcast %c7_i32_0 : i32 to vector<16x128xi32>
    %6 = arith.cmpi eq, %2, %5 : vector<16x128xi32>
    %c0 = arith.constant 0 : index
    %c0_1 = arith.constant 0 : index
    %7 = vector.load %arg1[%c0, %c0_1] : memref<16x144xf32, #tpu.memory_space<vmem>>, vector<16x144xf32>
    %c0_2 = arith.constant 0 : index
    %c0_3 = arith.constant 0 : index
    %8 = vector.load %arg2[%c0_2, %c0_3] : memref<528x128xf32, #tpu.memory_space<vmem>>, vector<144x128xf32>
    %cst = arith.constant dense<0.000000e+00> : vector<16x128xf32>
    %9 = tpu.matmul %7, %8, %cst {dimension_numbers = #tpu.dot_dimension_numbers<[1], [0], [0], [1], [0, 0, 1, 1], [], []>} : vector<16x144xf32>, vector<144x128xf32>, vector<16x128xf32> -> vector<16x128xf32>
    %c0_4 = arith.constant 0 : index
    %c0_5 = arith.constant 0 : index
    %10 = vector.load %arg4[%c0_4, %c0_5] : memref<4x256xf32, #tpu.memory_space<vmem>>, vector<1x128xf32>
    %11 = vector.broadcast %10 : vector<1x128xf32> to vector<16x128xf32>
    %12 = arith.addf %9, %11 : vector<16x128xf32>
    %c8 = arith.constant 8 : index
    %c0_6 = arith.constant 0 : index
    %13 = vector.load %arg6[%c8, %c0_6] : memref<32x128xf32, #tpu.memory_space<vmem>>, vector<16x128xf32>
    tpu.vector_store %arg6[%c8, %c0_6], %12 {strides = array<i32>} : memref<32x128xf32, #tpu.memory_space<vmem>>, vector<16x128xf32>,
    %c9 = arith.constant 9 : index
    %c0_7 = arith.constant 0 : index
    %14 = vector.load %arg6[%c9, %c0_7] : memref<32x128xf32, #tpu.memory_space<vmem>>, vector<16x128xf32>
    %cst_8 = arith.constant 0.000000e+00 : f32
    %15 = vector.broadcast %cst_8 : f32 to vector<16x128xf32>
    %16 = arith.select %6, %15, %14 : vector<16x128xi1>, vector<16x128xf32>
    %17 = tpu.concatenate %12, %16 in 1 : vector<16x128xf32>, vector<16x128xf32> -> vector<16x256xf32>
    %c0_9 = arith.constant 0 : index
    %c0_10 = arith.constant 0 : index
    %18 = vector.load %arg3[%c0_9, %c0_10] : memref<512x256xf32, #tpu.memory_space<vmem>>, vector<256x256xf32>
    %cst_11 = arith.constant dense<0.000000e+00> : vector<16x256xf32>
    %19 = tpu.matmul %17, %18, %cst_11 {dimension_numbers = #tpu.dot_dimension_numbers<[1], [0], [0], [1], [0, 0, 1, 1], [], []>} : vector<16x256xf32>, vector<256x256xf32>, vector<16x256xf32> -> vector<16x256xf32>
    %c1 = arith.constant 1 : index
    %c0_12 = arith.constant 0 : index
    %20 = vector.load %arg4[%c1, %c0_12] : memref<4x256xf32, #tpu.memory_space<vmem>>, vector<1x256xf32>
    %21 = vector.broadcast %20 : vector<1x256xf32> to vector<16x256xf32>
    %22 = arith.addf %19, %21 : vector<16x256xf32>
    %23 = vector.extract_strided_slice %22 {offsets = [0, 0], sizes = [16, 128], strides = [1, 1]} : vector<16x256xf32> to vector<16x128xf32>
    %24 = vector.extract_strided_slice %22 {offsets = [0, 128], sizes = [16, 128], strides = [1, 1]} : vector<16x256xf32> to vector<16x128xf32>
    %c8_13 = arith.constant 8 : index
    %c0_14 = arith.constant 0 : index
    %25 = vector.load %arg6[%c8_13, %c0_14] : memref<32x128xf32, #tpu.memory_space<vmem>>, vector<16x128xf32>
    tpu.vector_store %arg6[%c8_13, %c0_14], %24 {strides = array<i32>} : memref<32x128xf32, #tpu.memory_space<vmem>>, vector<16x128xf32>,
    %c7 = arith.constant 7 : index
    %c0_15 = arith.constant 0 : index
    %26 = vector.load %arg6[%c7, %c0_15] : memref<32x128xf32, #tpu.memory_space<vmem>>, vector<16x128xf32>
    %cst_16 = arith.constant 0.000000e+00 : f32
    %27 = vector.broadcast %cst_16 : f32 to vector<16x128xf32>
    %28 = arith.select %4, %27, %26 : vector<16x128xi1>, vector<16x128xf32>
    %29 = tpu.concatenate %28, %23, %24 in 1 : vector<16x128xf32>, vector<16x128xf32>, vector<16x128xf32> -> vector<16x384xf32>
    %c144 = arith.constant 144 : index
    %c0_17 = arith.constant 0 : index
    %30 = vector.load %arg2[%c144, %c0_17] : memref<528x128xf32, #tpu.memory_space<vmem>>, vector<384x128xf32>
    %cst_18 = arith.constant dense<0.000000e+00> : vector<16x128xf32>
    %31 = tpu.matmul %29, %30, %cst_18 {dimension_numbers = #tpu.dot_dimension_numbers<[1], [0], [0], [1], [0, 0, 1, 1], [], []>} : vector<16x384xf32>, vector<384x128xf32>, vector<16x128xf32> -> vector<16x128xf32>
    %c2 = arith.constant 2 : index
    %c0_19 = arith.constant 0 : index
    %32 = vector.load %arg4[%c2, %c0_19] : memref<4x256xf32, #tpu.memory_space<vmem>>, vector<1x128xf32>
    %33 = vector.broadcast %32 : vector<1x128xf32> to vector<16x128xf32>
    %34 = arith.addf %31, %33 : vector<16x128xf32>
    %c8_20 = arith.constant 8 : index
    %c0_21 = arith.constant 0 : index
    %35 = vector.load %arg6[%c8_20, %c0_21] : memref<32x128xf32, #tpu.memory_space<vmem>>, vector<16x128xf32>
    tpu.vector_store %arg6[%c8_20, %c0_21], %34 {strides = array<i32>} : memref<32x128xf32, #tpu.memory_space<vmem>>, vector<16x128xf32>,
    %c9_22 = arith.constant 9 : index
    %c0_23 = arith.constant 0 : index
    %36 = vector.load %arg6[%c9_22, %c0_23] : memref<32x128xf32, #tpu.memory_space<vmem>>, vector<16x128xf32>
    %cst_24 = arith.constant 0.000000e+00 : f32
    %37 = vector.broadcast %cst_24 : f32 to vector<16x128xf32>
    %38 = arith.select %6, %37, %36 : vector<16x128xi1>, vector<16x128xf32>
    %39 = tpu.concatenate %34, %38 in 1 : vector<16x128xf32>, vector<16x128xf32> -> vector<16x256xf32>
    %c256 = arith.constant 256 : index
    %c0_25 = arith.constant 0 : index
    %40 = vector.load %arg3[%c256, %c0_25] : memref<512x256xf32, #tpu.memory_space<vmem>>, vector<256x256xf32>
    %cst_26 = arith.constant dense<0.000000e+00> : vector<16x256xf32>
    %41 = tpu.matmul %39, %40, %cst_26 {dimension_numbers = #tpu.dot_dimension_numbers<[1], [0], [0], [1], [0, 0, 1, 1], [], []>} : vector<16x256xf32>, vector<256x256xf32>, vector<16x256xf32> -> vector<16x256xf32>
    %c3 = arith.constant 3 : index
    %c0_27 = arith.constant 0 : index
    %42 = vector.load %arg4[%c3, %c0_27] : memref<4x256xf32, #tpu.memory_space<vmem>>, vector<1x256xf32>
    %43 = vector.broadcast %42 : vector<1x256xf32> to vector<16x256xf32>
    %44 = arith.addf %41, %43 : vector<16x256xf32>
    %c0_28 = arith.constant 0 : index
    %c0_29 = arith.constant 0 : index
    %45 = vector.load %arg5[%c0_28, %c0_29] : memref<16x256xf32, #tpu.memory_space<vmem>>, vector<16x256xf32>
    tpu.vector_store %arg5[%c0_28, %c0_29], %44 {strides = array<i32>} : memref<16x256xf32, #tpu.memory_space<vmem>>, vector<16x256xf32>,
    return
  }
  func.func @transform_0(%arg0: i32) -> (i32, i32) {
    %c0_i32 = arith.constant 0 : i32
    %c0_i32_0 = arith.constant 0 : i32
    return %arg0, %c0_i32 : i32, i32
  }
  func.func @transform_1(%arg0: i32) -> (i32, i32) {
    %c0_i32 = arith.constant 0 : i32
    %c0_i32_0 = arith.constant 0 : i32
    %c0_i32_1 = arith.constant 0 : i32
    return %c0_i32, %c0_i32_0 : i32, i32
  }
  func.func @transform_2(%arg0: i32) -> (i32, i32) {
    %c0_i32 = arith.constant 0 : i32
    %c0_i32_0 = arith.constant 0 : i32
    %c0_i32_1 = arith.constant 0 : i32
    return %c0_i32, %c0_i32_0 : i32, i32
  }
  func.func @transform_3(%arg0: i32) -> (i32, i32) {
    %c0_i32 = arith.constant 0 : i32
    %c0_i32_0 = arith.constant 0 : i32
    %c0_i32_1 = arith.constant 0 : i32
    return %c0_i32, %c0_i32_0 : i32, i32
  }
  func.func @transform_4(%arg0: i32) -> (i32, i32) {
    %c0_i32 = arith.constant 0 : i32
    %c0_i32_0 = arith.constant 0 : i32
    return %arg0, %c0_i32 : i32, i32
  }
}

</mosaic_0001>

<llo_original>
// kernel: _lambda_.1
$region0: #{_lambda_.1}
  #allocation0 [shape = 'u32[]', space=smem, size = 0x4, offset = 0x4, fixed_abs, tag = 'smem constant byte address 0x4 - core index']
  #allocation1 [shape = 'u32[72,128]{1,0:T(1,128)}', space=vmem, size = 0x9000, scoped, tag = 'internal scratch']
  #allocation2 [shape = 'f32[32,128]{1,0:T(8,128)}', space=vmem, size = 0x4000, scoped, tag = 'scratch operand']
  %s0 = inlined_call_operand.vmem [shape: f32[16,144], index: 0, kind: input, shape index: {}]
  %s1 = inlined_call_operand.vmem [shape: f32[528,128], index: 1, kind: input, shape index: {}]
  %s2 = inlined_call_operand.hbm [shape: f32[512,256], index: 2, kind: input, shape index: {}]
  %s3 = inlined_call_operand.vmem [shape: f32[4,256], index: 3, kind: input, shape index: {}]
  %s4 = inlined_call_operand.vmem [shape: f32[16,256], index: 4, kind: output, shape index: {}]
  %s5 = sld [smem:[#allocation0]]
  $region30: #{_lambda_.1} parent=0
    _
  %s7 = ssub.s32 1, %s5
  %s8 = scalar_select 0, %s7, %s5
  $region1: #{_lambda_.1} parent=0
    #allocation3 [shape = 'u8[524288]{0}', space=vmem, size = 0x80000, scoped, tag = 'input window, operand 2, single buffered']
    #allocation4 [shape = 's32[1]{0}', space=sflag, size = 0x4, scoped, tag = 'scoped memory for _lambda_.1']
    %9 = vsyncpa [#allocation4], 0
    // Predicated region
    $region2: #{_lambda_.1} parent=1 // pred_check
      _
    $region3: #{_lambda_.1} parent=1 // pred_check_branch
      %11 = sbr.rel (0) target = $region5
    $region4: #{_lambda_.1} parent=1 // pred_region
      _
    $region5: #{_lambda_.1} parent=1 // pred_fallthru
      _
    // Predicated region
    $region6: #{_lambda_.1} parent=1 // pred_check
      _
    $region7: #{_lambda_.1} parent=1 // pred_check_branch
      %13 = sbr.rel (0) target = $region9
    $region8: #{_lambda_.1} parent=1 // pred_region
      _
    $region9: #{_lambda_.1} parent=1 // pred_fallthru
      _
    // Predicated region
    $region10: #{_lambda_.1} parent=1 // pred_check
      _
    $region11: #{_lambda_.1} parent=1 // pred_check_branch
      %15 = sbr.rel (0) target = $region13
    $region12: #{_lambda_.1} parent=1 // pred_region
      %17 = vsyncadd [#allocation4], 0
      %s18 = sshll.u32 %s2, 4
      %s19 = int_to_ptr.hbm [resolvable:$true] %s18
      %s20 = sshll.u32 [#allocation3], 4
      %s21 = int_to_ptr.vmem [resolvable:$true] %s20
      %26 = dma.hbm_to_vmem [thread:$0]  %s19, 16384, %s21, [#allocation4], 256, 256, 16
    $region13: #{_lambda_.1} parent=1 // pred_fallthru
      _
    // Predicated region
    $region14: #{_lambda_.1} parent=1 // pred_check
      _
    $region15: #{_lambda_.1} parent=1 // pred_check_branch
      %28 = sbr.rel (0) target = $region17
    $region16: #{_lambda_.1} parent=1 // pred_region
      _
    $region17: #{_lambda_.1} parent=1 // pred_fallthru
      _
    // Predicated region
    $region18: #{_lambda_.1} parent=1 // pred_check
      _
    $region19: #{_lambda_.1} parent=1 // pred_check_branch
      %30 = sbr.rel (0) target = $region21
    $region20: #{_lambda_.1} parent=1 // pred_region
      %32 = dma.done [#allocation4], 16384
    $region21: #{_lambda_.1} parent=1 // pred_fallthru
      _
    %v33 = vlaneseq
    %v34 = vshrl.u32 %v33, 7
    %v35 = vadd.s32 %v34, 8
    %v36 = vand.u32 %v34, 7
    %v37 = vand.u32 %v35, 7
    %vm38 = vcmp.eq.s32.totalorder %v36, 0
    %vm39 = vcmp.eq.s32.totalorder %v37, 0
    %vm40 = vcmp.eq.s32.totalorder %v36, 7
    %vm41 = vcmp.eq.s32.totalorder %v37, 7
    %v42 = vld [vmem:[%s0] sm:$0xff]
    %v43 = vld [vmem:[%s0 + $0x8] sm:$0xff]
    %v44 = vld [vmem:[%s0 + $0x10] sm:$0xff]
    %v45 = vld [vmem:[%s0 + $0x18] sm:$0xff]
    %v46 = vld [vmem:[%s1] sm:$0xff]
    %v47 = vld [vmem:[%s1 + $0x8] sm:$0xff]
    %v48 = vld [vmem:[%s1 + $0x10] sm:$0xff]
    %v49 = vld [vmem:[%s1 + $0x18] sm:$0xff]
    %v50 = vld [vmem:[%s1 + $0x20] sm:$0xff]
    %v51 = vld [vmem:[%s1 + $0x28] sm:$0xff]
    %v52 = vld [vmem:[%s1 + $0x30] sm:$0xff]
    %v53 = vld [vmem:[%s1 + $0x38] sm:$0xff]
    %v54 = vld [vmem:[%s1 + $0x40] sm:$0xff]
    %v55 = vld [vmem:[%s1 + $0x48] sm:$0xff]
    %v56 = vld [vmem:[%s1 + $0x50] sm:$0xff]
    %v57 = vld [vmem:[%s1 + $0x58] sm:$0xff]
    %v58 = vld [vmem:[%s1 + $0x60] sm:$0xff]
    %v59 = vld [vmem:[%s1 + $0x68] sm:$0xff]
    %v60 = vld [vmem:[%s1 + $0x70] sm:$0xff]
    %v61 = vld [vmem:[%s1 + $0x78] sm:$0xff]
    %v62 = vld [vmem:[%s1 + $0x80] sm:$0xff]
    %v63 = vld [vmem:[%s1 + $0x88] sm:$0xff]
    %v64 = vld [vmem:[%s3] sm:$0x1]
    %v65 = vperm.slane %v64, 0
    %vm66 = vcmask 130048
    %v68 = vsel %vm66, %v43, 0
    %v71 = vsel %vm66, %v45, 0
    %73 = vmatpush.msra.mxu0 %v61
    %74 = vmatpush.msra.mxu0 %v60
    %75 = vmatpush.msra.mxu0 %v59
    %76 = vmatpush.msra.mxu0 %v58
    %77 = vmatpush.msra.mxu0 %v57
    %78 = vmatpush.msra.mxu0 %v56
    %79 = vmatpush.msra.mxu0 %v55
    %80 = vmatpush.msra.mxu0 %v54
    %81 = vmatpush.msra.mxu0 %v53
    %82 = vmatpush.msra.mxu0 %v52
    %83 = vmatpush.msra.mxu0 %v51
    %84 = vmatpush.msra.mxu0 %v50
    %85 = vmatpush.msra.mxu0 %v49
    %86 = vmatpush.msra.mxu0 %v48
    %87 = vmatpush.msra.mxu0 %v47
    %88 = vmatpush.msra.mxu0 %v46
    %89 = vmatmul.f32.gmra.mxu0 %v42
    %v90 = vpop.f32.mrf.mxu0
    %v91 = vadd.f32 %v65, %v90
    %92 = vmatmul.f32.gmra.mxu0 %v44
    %v93 = vpop.f32.mrf.mxu0
    %v94 = vadd.f32 %v65, %v93
    %95 = vdwg.mxu0
    %96 = vmatpush.msra.mxu0 0.0
    %97 = vmatpush.msra.mxu0 0.0
    %98 = vmatpush.msra.mxu0 0.0
    %99 = vmatpush.msra.mxu0 0.0
    %100 = vmatpush.msra.mxu0 0.0
    %101 = vmatpush.msra.mxu0 0.0
    %102 = vmatpush.msra.mxu0 0.0
    %103 = vmatpush.msra.mxu0 0.0
    %104 = vmatpush.msra.mxu0 0.0
    %105 = vmatpush.msra.mxu0 0.0
    %106 = vmatpush.msra.mxu0 0.0
    %107 = vmatpush.msra.mxu0 0.0
    %108 = vmatpush.msra.mxu0 0.0
    %109 = vmatpush.msra.mxu0 0.0
    %110 = vmatpush.msra.mxu0 %v63
    %111 = vmatpush.msra.mxu0 %v62
    %112 = vmatmul.f32.gmra.mxu0 %v68
    %v113 = vpop.f32.mrf.mxu0
    %v114 = vadd.f32 %v91, %v113
    %115 = vmatmul.f32.gmra.mxu0 %v71
    %v116 = vpop.f32.mrf.mxu0
    %v117 = vadd.f32 %v94, %v116
    %118 = vdwg.mxu0
    %119 = vst [vmem:[#allocation2 + $0x8] sm:$0xff] %v114
    %120 = vst [vmem:[#allocation2 + $0x10] sm:$0xff] %v117
    %v121 = vld [vmem:[#allocation2 + $0x9] sm:$0xff]
    %v122 = vld [vmem:[#allocation2 + $0x11] sm:$0xff]
    %v123 = vsel %vm40, 0.0, %v121
    %v124 = vsel %vm41, 0.0, %v122
    %v125 = vld [vmem:[#allocation3] sm:$0xff]
    %v126 = vld [vmem:[#allocation3 + $0x8] sm:$0xff]
    %v127 = vld [vmem:[#allocation3 + $0x10] sm:$0xff]
    %v128 = vld [vmem:[#allocation3 + $0x18] sm:$0xff]
    %v129 = vld [vmem:[#allocation3 + $0x20] sm:$0xff]
    %v130 = vld [vmem:[#allocation3 + $0x28] sm:$0xff]
    %v131 = vld [vmem:[#allocation3 + $0x30] sm:$0xff]
    %v132 = vld [vmem:[#allocation3 + $0x38] sm:$0xff]
    %v133 = vld [vmem:[#allocation3 + $0x40] sm:$0xff]
    %v134 = vld [vmem:[#allocation3 + $0x48] sm:$0xff]
    %v135 = vld [vmem:[#allocation3 + $0x50] sm:$0xff]
    %v136 = vld [vmem:[#allocation3 + $0x58] sm:$0xff]
    %v137 = vld [vmem:[#allocation3 + $0x60] sm:$0xff]
    %v138 = vld [vmem:[#allocation3 + $0x68] sm:$0xff]
    %v139 = vld [vmem:[#allocation3 + $0x70] sm:$0xff]
    %v140 = vld [vmem:[#allocation3 + $0x78] sm:$0xff]
    %v141 = vld [vmem:[#allocation3 + $0x80] sm:$0xff]
    %v142 = vld [vmem:[#allocation3 + $0x88] sm:$0xff]
    %v143 = vld [vmem:[#allocation3 + $0x90] sm:$0xff]
    %v144 = vld [vmem:[#allocation3 + $0x98] sm:$0xff]
    %v145 = vld [vmem:[#allocation3 + $0xa0] sm:$0xff]
    %v146 = vld [vmem:[#allocation3 + $0xa8] sm:$0xff]
    %v147 = vld [vmem:[#allocation3 + $0xb0] sm:$0xff]
    %v148 = vld [vmem:[#allocation3 + $0xb8] sm:$0xff]
    %v149 = vld [vmem:[#allocation3 + $0xc0] sm:$0xff]
    %v150 = vld [vmem:[#allocation3 + $0xc8] sm:$0xff]
    %v151 = vld [vmem:[#allocation3 + $0xd0] sm:$0xff]
    %v152 = vld [vmem:[#allocation3 + $0xd8] sm:$0xff]
    %v153 = vld [vmem:[#allocation3 + $0xe0] sm:$0xff]
    %v154 = vld [vmem:[#allocation3 + $0xe8] sm:$0xff]
    %v155 = vld [vmem:[#allocation3 + $0xf0] sm:$0xff]
    %v156 = vld [vmem:[#allocation3 + $0xf8] sm:$0xff]
    %v157 = vld [vmem:[#allocation3 + $0x100] sm:$0xff]
    %v158 = vld [vmem:[#allocation3 + $0x108] sm:$0xff]
    %v159 = vld [vmem:[#allocation3 + $0x110] sm:$0xff]
    %v160 = vld [vmem:[#allocation3 + $0x118] sm:$0xff]
    %v161 = vld [vmem:[#allocation3 + $0x120] sm:$0xff]
    %v162 = vld [vmem:[#allocation3 + $0x128] sm:$0xff]
    %v163 = vld [vmem:[#allocation3 + $0x130] sm:$0xff]
    %v164 = vld [vmem:[#allocation3 + $0x138] sm:$0xff]
    %v165 = vld [vmem:[#allocation3 + $0x140] sm:$0xff]
    %v166 = vld [vmem:[#allocation3 + $0x148] sm:$0xff]
    %v167 = vld [vmem:[#allocation3 + $0x150] sm:$0xff]
    %v168 = vld [vmem:[#allocation3 + $0x158] sm:$0xff]
    %v169 = vld [vmem:[#allocation3 + $0x160] sm:$0xff]
    %v170 = vld [vmem:[#allocation3 + $0x168] sm:$0xff]
    %v171 = vld [vmem:[#allocation3 + $0x170] sm:$0xff]
    %v172 = vld [vmem:[#allocation3 + $0x178] sm:$0xff]
    %v173 = vld [vmem:[#allocation3 + $0x180] sm:$0xff]
    %v174 = vld [vmem:[#allocation3 + $0x188] sm:$0xff]
    %v175 = vld [vmem:[#allocation3 + $0x190] sm:$0xff]
    %v176 = vld [vmem:[#allocation3 + $0x198] sm:$0xff]
    %v177 = vld [vmem:[#allocation3 + $0x1a0] sm:$0xff]
    %v178 = vld [vmem:[#allocation3 + $0x1a8] sm:$0xff]
    %v179 = vld [vmem:[#allocation3 + $0x1b0] sm:$0xff]
    %v180 = vld [vmem:[#allocation3 + $0x1b8] sm:$0xff]
    %v181 = vld [vmem:[#allocation3 + $0x1c0] sm:$0xff]
    %v182 = vld [vmem:[#allocation3 + $0x1c8] sm:$0xff]
    %v183 = vld [vmem:[#allocation3 + $0x1d0] sm:$0xff]
    %v184 = vld [vmem:[#allocation3 + $0x1d8] sm:$0xff]
    %v185 = vld [vmem:[#allocation3 + $0x1e0] sm:$0xff]
    %v186 = vld [vmem:[#allocation3 + $0x1e8] sm:$0xff]
    %v187 = vld [vmem:[#allocation3 + $0x1f0] sm:$0xff]
    %v188 = vld [vmem:[#allocation3 + $0x1f8] sm:$0xff]
    %s189 = scalar_lea.vmem %s3, 1
    %v190 = vld [vmem:[%s189] ss:$4 sm:$0x3]
    %v192 = vperm.slane %v190, 0
    %v193 = vperm.slane %v190, 1
    %196 = vmatpush.msra.mxu0 %v155
    %197 = vmatpush.msra.mxu0 %v153
    %198 = vmatpush.msra.mxu0 %v151
    %199 = vmatpush.msra.mxu0 %v149
    %200 = vmatpush.msra.mxu0 %v147
    %201 = vmatpush.msra.mxu0 %v145
    %202 = vmatpush.msra.mxu0 %v143
    %203 = vmatpush.msra.mxu0 %v141
    %204 = vmatpush.msra.mxu0 %v139
    %205 = vmatpush.msra.mxu0 %v137
    %206 = vmatpush.msra.mxu0 %v135
    %207 = vmatpush.msra.mxu0 %v133
    %208 = vmatpush.msra.mxu0 %v131
    %209 = vmatpush.msra.mxu0 %v129
    %210 = vmatpush.msra.mxu0 %v127
    %211 = vmatpush.msra.mxu0 %v125
    %212 = vmatmul.f32.gmra.mxu0 %v114
    %v213 = vpop.f32.mrf.mxu0
    %v214 = vadd.f32 %v192, %v213
    %215 = vmatmul.f32.gmra.mxu0 %v117
    %v216 = vpop.f32.mrf.mxu0
    %v217 = vadd.f32 %v192, %v216
    %218 = vdwg.mxu0
    %219 = vmatpush.msra.mxu0 %v187
    %220 = vmatpush.msra.mxu0 %v185
    %221 = vmatpush.msra.mxu0 %v183
    %222 = vmatpush.msra.mxu0 %v181
    %223 = vmatpush.msra.mxu0 %v179
    %224 = vmatpush.msra.mxu0 %v177
    %225 = vmatpush.msra.mxu0 %v175
    %226 = vmatpush.msra.mxu0 %v173
    %227 = vmatpush.msra.mxu0 %v171
    %228 = vmatpush.msra.mxu0 %v169
    %229 = vmatpush.msra.mxu0 %v167
    %230 = vmatpush.msra.mxu0 %v165
    %231 = vmatpush.msra.mxu0 %v163
    %232 = vmatpush.msra.mxu0 %v161
    %233 = vmatpush.msra.mxu0 %v159
    %234 = vmatpush.msra.mxu0 %v157
    %235 = vmatmul.f32.gmra.mxu0 %v123
    %v236 = vpop.f32.mrf.mxu0
    %v237 = vadd.f32 %v214, %v236
    %238 = vmatmul.f32.gmra.mxu0 %v124
    %v239 = vpop.f32.mrf.mxu0
    %v240 = vadd.f32 %v217, %v239
    %241 = vdwg.mxu0
    %242 = vmatpush.msra.mxu0 %v156
    %243 = vmatpush.msra.mxu0 %v154
    %244 = vmatpush.msra.mxu0 %v152
    %245 = vmatpush.msra.mxu0 %v150
    %246 = vmatpush.msra.mxu0 %v148
    %247 = vmatpush.msra.mxu0 %v146
    %248 = vmatpush.msra.mxu0 %v144
    %249 = vmatpush.msra.mxu0 %v142
    %250 = vmatpush.msra.mxu0 %v140
    %251 = vmatpush.msra.mxu0 %v138
    %252 = vmatpush.msra.mxu0 %v136
    %253 = vmatpush.msra.mxu0 %v134
    %254 = vmatpush.msra.mxu0 %v132
    %255 = vmatpush.msra.mxu0 %v130
    %256 = vmatpush.msra.mxu0 %v128
    %257 = vmatpush.msra.mxu0 %v126
    %258 = vmatmul.f32.gmra.mxu0 %v114
    %v259 = vpop.f32.mrf.mxu0
    %v260 = vadd.f32 %v193, %v259
    %261 = vmatmul.f32.gmra.mxu0 %v117
    %v262 = vpop.f32.mrf.mxu0
    %v263 = vadd.f32 %v193, %v262
    %264 = vdwg.mxu0
    %265 = vmatpush.msra.mxu0 %v188
    %266 = vmatpush.msra.mxu0 %v186
    %267 = vmatpush.msra.mxu0 %v184
    %268 = vmatpush.msra.mxu0 %v182
    %269 = vmatpush.msra.mxu0 %v180
    %270 = vmatpush.msra.mxu0 %v178
    %271 = vmatpush.msra.mxu0 %v176
    %272 = vmatpush.msra.mxu0 %v174
    %273 = vmatpush.msra.mxu0 %v172
    %274 = vmatpush.msra.mxu0 %v170
    %275 = vmatpush.msra.mxu0 %v168
    %276 = vmatpush.msra.mxu0 %v166
    %277 = vmatpush.msra.mxu0 %v164
    %278 = vmatpush.msra.mxu0 %v162
    %279 = vmatpush.msra.mxu0 %v160
    %280 = vmatpush.msra.mxu0 %v158
    %281 = vmatmul.f32.gmra.mxu0 %v123
    %v282 = vpop.f32.mrf.mxu0
    %v283 = vadd.f32 %v260, %v282
    %284 = vmatmul.f32.gmra.mxu0 %v124
    %v285 = vpop.f32.mrf.mxu0
    %v286 = vadd.f32 %v263, %v285
    %287 = vdwg.mxu0
    %288 = vst [vmem:[#allocation2 + $0x8] sm:$0xff] %v283
    %289 = vst [vmem:[#allocation2 + $0x10] sm:$0xff] %v286
    %v290 = vld [vmem:[#allocation2 + $0x7] sm:$0xff]
    %v291 = vld [vmem:[#allocation2 + $0xf] sm:$0xff]
    %v292 = vsel %vm38, 0.0, %v290
    %v293 = vsel %vm39, 0.0, %v291
    %v294 = vld [vmem:[%s1 + $0x90] sm:$0xff]
    %v295 = vld [vmem:[%s1 + $0x98] sm:$0xff]
    %v296 = vld [vmem:[%s1 + $0xa0] sm:$0xff]
    %v297 = vld [vmem:[%s1 + $0xa8] sm:$0xff]
    %v298 = vld [vmem:[%s1 + $0xb0] sm:$0xff]
    %v299 = vld [vmem:[%s1 + $0xb8] sm:$0xff]
    %v300 = vld [vmem:[%s1 + $0xc0] sm:$0xff]
    %v301 = vld [vmem:[%s1 + $0xc8] sm:$0xff]
    %v302 = vld [vmem:[%s1 + $0xd0] sm:$0xff]
    %v303 = vld [vmem:[%s1 + $0xd8] sm:$0xff]
    %v304 = vld [vmem:[%s1 + $0xe0] sm:$0xff]
    %v305 = vld [vmem:[%s1 + $0xe8] sm:$0xff]
    %v306 = vld [vmem:[%s1 + $0xf0] sm:$0xff]
    %v307 = vld [vmem:[%s1 + $0xf8] sm:$0xff]
    %v308 = vld [vmem:[%s1 + $0x100] sm:$0xff]
    %v309 = vld [vmem:[%s1 + $0x108] sm:$0xff]
    %v310 = vld [vmem:[%s1 + $0x110] sm:$0xff]
    %v311 = vld [vmem:[%s1 + $0x118] sm:$0xff]
    %v312 = vld [vmem:[%s1 + $0x120] sm:$0xff]
    %v313 = vld [vmem:[%s1 + $0x128] sm:$0xff]
    %v314 = vld [vmem:[%s1 + $0x130] sm:$0xff]
    %v315 = vld [vmem:[%s1 + $0x138] sm:$0xff]
    %v316 = vld [vmem:[%s1 + $0x140] sm:$0xff]
    %v317 = vld [vmem:[%s1 + $0x148] sm:$0xff]
    %v318 = vld [vmem:[%s1 + $0x150] sm:$0xff]
    %v319 = vld [vmem:[%s1 + $0x158] sm:$0xff]
    %v320 = vld [vmem:[%s1 + $0x160] sm:$0xff]
    %v321 = vld [vmem:[%s1 + $0x168] sm:$0xff]
    %v322 = vld [vmem:[%s1 + $0x170] sm:$0xff]
    %v323 = vld [vmem:[%s1 + $0x178] sm:$0xff]
    %v324 = vld [vmem:[%s1 + $0x180] sm:$0xff]
    %v325 = vld [vmem:[%s1 + $0x188] sm:$0xff]
    %v326 = vld [vmem:[%s1 + $0x190] sm:$0xff]
    %v327 = vld [vmem:[%s1 + $0x198] sm:$0xff]
    %v328 = vld [vmem:[%s1 + $0x1a0] sm:$0xff]
    %v329 = vld [vmem:[%s1 + $0x1a8] sm:$0xff]
    %v330 = vld [vmem:[%s1 + $0x1b0] sm:$0xff]
    %v331 = vld [vmem:[%s1 + $0x1b8] sm:$0xff]
    %v332 = vld [vmem:[%s1 + $0x1c0] sm:$0xff]
    %v333 = vld [vmem:[%s1 + $0x1c8] sm:$0xff]
    %v334 = vld [vmem:[%s1 + $0x1d0] sm:$0xff]
    %v335 = vld [vmem:[%s1 + $0x1d8] sm:$0xff]
    %v336 = vld [vmem:[%s1 + $0x1e0] sm:$0xff]
    %v337 = vld [vmem:[%s1 + $0x1e8] sm:$0xff]
    %v338 = vld [vmem:[%s1 + $0x1f0] sm:$0xff]
    %v339 = vld [vmem:[%s1 + $0x1f8] sm:$0xff]
    %v340 = vld [vmem:[%s1 + $0x200] sm:$0xff]
    %v341 = vld [vmem:[%s1 + $0x208] sm:$0xff]
    %v342 = vld [vmem:[%s3 + $0x2] sm:$0x1]
    %v343 = vperm.slane %v342, 0
    %344 = vmatpush.msra.mxu0 %v309
    %345 = vmatpush.msra.mxu0 %v308
    %346 = vmatpush.msra.mxu0 %v307
    %347 = vmatpush.msra.mxu0 %v306
    %348 = vmatpush.msra.mxu0 %v305
    %349 = vmatpush.msra.mxu0 %v304
    %350 = vmatpush.msra.mxu0 %v303
    %351 = vmatpush.msra.mxu0 %v302
    %352 = vmatpush.msra.mxu0 %v301
    %353 = vmatpush.msra.mxu0 %v300
    %354 = vmatpush.msra.mxu0 %v299
    %355 = vmatpush.msra.mxu0 %v298
    %356 = vmatpush.msra.mxu0 %v297
    %357 = vmatpush.msra.mxu0 %v296
    %358 = vmatpush.msra.mxu0 %v295
    %359 = vmatpush.msra.mxu0 %v294
    %360 = vmatmul.f32.gmra.mxu0 %v292
    %v361 = vpop.f32.mrf.mxu0
    %v362 = vadd.f32 %v343, %v361
    %363 = vmatmul.f32.gmra.mxu0 %v293
    %v364 = vpop.f32.mrf.mxu0
    %v365 = vadd.f32 %v343, %v364
    %366 = vdwg.mxu0
    %367 = vmatpush.msra.mxu0 %v325
    %368 = vmatpush.msra.mxu0 %v324
    %369 = vmatpush.msra.mxu0 %v323
    %370 = vmatpush.msra.mxu0 %v322
    %371 = vmatpush.msra.mxu0 %v321
    %372 = vmatpush.msra.mxu0 %v320
    %373 = vmatpush.msra.mxu0 %v319
    %374 = vmatpush.msra.mxu0 %v318
    %375 = vmatpush.msra.mxu0 %v317
    %376 = vmatpush.msra.mxu0 %v316
    %377 = vmatpush.msra.mxu0 %v315
    %378 = vmatpush.msra.mxu0 %v314
    %379 = vmatpush.msra.mxu0 %v313
    %380 = vmatpush.msra.mxu0 %v312
    %381 = vmatpush.msra.mxu0 %v311
    %382 = vmatpush.msra.mxu0 %v310
    %383 = vmatmul.f32.gmra.mxu0 %v237
    %v384 = vpop.f32.mrf.mxu0
    %v385 = vadd.f32 %v362, %v384
    %386 = vmatmul.f32.gmra.mxu0 %v240
    %v387 = vpop.f32.mrf.mxu0
    %v388 = vadd.f32 %v365, %v387
    %389 = vdwg.mxu0
    %390 = vmatpush.msra.mxu0 %v341
    %391 = vmatpush.msra.mxu0 %v340
    %392 = vmatpush.msra.mxu0 %v339
    %393 = vmatpush.msra.mxu0 %v338
    %394 = vmatpush.msra.mxu0 %v337
    %395 = vmatpush.msra.mxu0 %v336
    %396 = vmatpush.msra.mxu0 %v335
    %397 = vmatpush.msra.mxu0 %v334
    %398 = vmatpush.msra.mxu0 %v333
    %399 = vmatpush.msra.mxu0 %v332
    %400 = vmatpush.msra.mxu0 %v331
    %401 = vmatpush.msra.mxu0 %v330
    %402 = vmatpush.msra.mxu0 %v329
    %403 = vmatpush.msra.mxu0 %v328
    %404 = vmatpush.msra.mxu0 %v327
    %405 = vmatpush.msra.mxu0 %v326
    %406 = vmatmul.f32.gmra.mxu0 %v283
    %v407 = vpop.f32.mrf.mxu0
    %v408 = vadd.f32 %v385, %v407
    %409 = vmatmul.f32.gmra.mxu0 %v286
    %v410 = vpop.f32.mrf.mxu0
    %v411 = vadd.f32 %v388, %v410
    %412 = vdwg.mxu0
    %413 = vst [vmem:[#allocation2 + $0x8] sm:$0xff] %v408
    %414 = vst [vmem:[#allocation2 + $0x10] sm:$0xff] %v411
    %v415 = vld [vmem:[#allocation2 + $0x9] sm:$0xff]
    %v416 = vld [vmem:[#allocation2 + $0x11] sm:$0xff]
    %v417 = vsel %vm40, 0.0, %v415
    %v418 = vsel %vm41, 0.0, %v416
    %v419 = vld [vmem:[#allocation3 + $0x200] sm:$0xff]
    %v420 = vld [vmem:[#allocation3 + $0x208] sm:$0xff]
    %v421 = vld [vmem:[#allocation3 + $0x210] sm:$0xff]
    %v422 = vld [vmem:[#allocation3 + $0x218] sm:$0xff]
    %v423 = vld [vmem:[#allocation3 + $0x220] sm:$0xff]
    %v424 = vld [vmem:[#allocation3 + $0x228] sm:$0xff]
    %v425 = vld [vmem:[#allocation3 + $0x230] sm:$0xff]
    %v426 = vld [vmem:[#allocation3 + $0x238] sm:$0xff]
    %v427 = vld [vmem:[#allocation3 + $0x240] sm:$0xff]
    %v428 = vld [vmem:[#allocation3 + $0x248] sm:$0xff]
    %v429 = vld [vmem:[#allocation3 + $0x250] sm:$0xff]
    %v430 = vld [vmem:[#allocation3 + $0x258] sm:$0xff]
    %v431 = vld [vmem:[#allocation3 + $0x260] sm:$0xff]
    %v432 = vld [vmem:[#allocation3 + $0x268] sm:$0xff]
    %v433 = vld [vmem:[#allocation3 + $0x270] sm:$0xff]
    %v434 = vld [vmem:[#allocation3 + $0x278] sm:$0xff]
    %v435 = vld [vmem:[#allocation3 + $0x280] sm:$0xff]
    %v436 = vld [vmem:[#allocation3 + $0x288] sm:$0xff]
    %v437 = vld [vmem:[#allocation3 + $0x290] sm:$0xff]
    %v438 = vld [vmem:[#allocation3 + $0x298] sm:$0xff]
    %v439 = vld [vmem:[#allocation3 + $0x2a0] sm:$0xff]
    %v440 = vld [vmem:[#allocation3 + $0x2a8] sm:$0xff]
    %v441 = vld [vmem:[#allocation3 + $0x2b0] sm:$0xff]
    %v442 = vld [vmem:[#allocation3 + $0x2b8] sm:$0xff]
    %v443 = vld [vmem:[#allocation3 + $0x2c0] sm:$0xff]
    %v444 = vld [vmem:[#allocation3 + $0x2c8] sm:$0xff]
    %v445 = vld [vmem:[#allocation3 + $0x2d0] sm:$0xff]
    %v446 = vld [vmem:[#allocation3 + $0x2d8] sm:$0xff]
    %v447 = vld [vmem:[#allocation3 + $0x2e0] sm:$0xff]
    %v448 = vld [vmem:[#allocation3 + $0x2e8] sm:$0xff]
    %v449 = vld [vmem:[#allocation3 + $0x2f0] sm:$0xff]
    %v450 = vld [vmem:[#allocation3 + $0x2f8] sm:$0xff]
    %v451 = vld [vmem:[#allocation3 + $0x300] sm:$0xff]
    %v452 = vld [vmem:[#allocation3 + $0x308] sm:$0xff]
    %v453 = vld [vmem:[#allocation3 + $0x310] sm:$0xff]
    %v454 = vld [vmem:[#allocation3 + $0x318] sm:$0xff]
    %v455 = vld [vmem:[#allocation3 + $0x320] sm:$0xff]
    %v456 = vld [vmem:[#allocation3 + $0x328] sm:$0xff]
    %v457 = vld [vmem:[#allocation3 + $0x330] sm:$0xff]
    %v458 = vld [vmem:[#allocation3 + $0x338] sm:$0xff]
    %v459 = vld [vmem:[#allocation3 + $0x340] sm:$0xff]
    %v460 = vld [vmem:[#allocation3 + $0x348] sm:$0xff]
    %v461 = vld [vmem:[#allocation3 + $0x350] sm:$0xff]
    %v462 = vld [vmem:[#allocation3 + $0x358] sm:$0xff]
    %v463 = vld [vmem:[#allocation3 + $0x360] sm:$0xff]
    %v464 = vld [vmem:[#allocation3 + $0x368] sm:$0xff]
    %v465 = vld [vmem:[#allocation3 + $0x370] sm:$0xff]
    %v466 = vld [vmem:[#allocation3 + $0x378] sm:$0xff]
    %v467 = vld [vmem:[#allocation3 + $0x380] sm:$0xff]
    %v468 = vld [vmem:[#allocation3 + $0x388] sm:$0xff]
    %v469 = vld [vmem:[#allocation3 + $0x390] sm:$0xff]
    %v470 = vld [vmem:[#allocation3 + $0x398] sm:$0xff]
    %v471 = vld [vmem:[#allocation3 + $0x3a0] sm:$0xff]
    %v472 = vld [vmem:[#allocation3 + $0x3a8] sm:$0xff]
    %v473 = vld [vmem:[#allocation3 + $0x3b0] sm:$0xff]
    %v474 = vld [vmem:[#allocation3 + $0x3b8] sm:$0xff]
    %v475 = vld [vmem:[#allocation3 + $0x3c0] sm:$0xff]
    %v476 = vld [vmem:[#allocation3 + $0x3c8] sm:$0xff]
    %v477 = vld [vmem:[#allocation3 + $0x3d0] sm:$0xff]
    %v478 = vld [vmem:[#allocation3 + $0x3d8] sm:$0xff]
    %v479 = vld [vmem:[#allocation3 + $0x3e0] sm:$0xff]
    %v480 = vld [vmem:[#allocation3 + $0x3e8] sm:$0xff]
    %v481 = vld [vmem:[#allocation3 + $0x3f0] sm:$0xff]
    %v482 = vld [vmem:[#allocation3 + $0x3f8] sm:$0xff]
    %s483 = scalar_lea.vmem %s3, 3
    %v484 = vld [vmem:[%s483] ss:$4 sm:$0x3]
    %v486 = vperm.slane %v484, 0
    %v487 = vperm.slane %v484, 1
    %490 = vmatpush.msra.mxu0 %v449
    %491 = vmatpush.msra.mxu0 %v447
    %492 = vmatpush.msra.mxu0 %v445
    %493 = vmatpush.msra.mxu0 %v443
    %494 = vmatpush.msra.mxu0 %v441
    %495 = vmatpush.msra.mxu0 %v439
    %496 = vmatpush.msra.mxu0 %v437
    %497 = vmatpush.msra.mxu0 %v435
    %498 = vmatpush.msra.mxu0 %v433
    %499 = vmatpush.msra.mxu0 %v431
    %500 = vmatpush.msra.mxu0 %v429
    %501 = vmatpush.msra.mxu0 %v427
    %502 = vmatpush.msra.mxu0 %v425
    %503 = vmatpush.msra.mxu0 %v423
    %504 = vmatpush.msra.mxu0 %v421
    %505 = vmatpush.msra.mxu0 %v419
    %506 = vmatmul.f32.gmra.mxu0 %v408
    %v507 = vpop.f32.mrf.mxu0
    %v508 = vadd.f32 %v486, %v507
    %509 = vmatmul.f32.gmra.mxu0 %v411
    %v510 = vpop.f32.mrf.mxu0
    %v511 = vadd.f32 %v486, %v510
    %512 = vdwg.mxu0
    %513 = vmatpush.msra.mxu0 %v481
    %514 = vmatpush.msra.mxu0 %v479
    %515 = vmatpush.msra.mxu0 %v477
    %516 = vmatpush.msra.mxu0 %v475
    %517 = vmatpush.msra.mxu0 %v473
    %518 = vmatpush.msra.mxu0 %v471
    %519 = vmatpush.msra.mxu0 %v469
    %520 = vmatpush.msra.mxu0 %v467
    %521 = vmatpush.msra.mxu0 %v465
    %522 = vmatpush.msra.mxu0 %v463
    %523 = vmatpush.msra.mxu0 %v461
    %524 = vmatpush.msra.mxu0 %v459
    %525 = vmatpush.msra.mxu0 %v457
    %526 = vmatpush.msra.mxu0 %v455
    %527 = vmatpush.msra.mxu0 %v453
    %528 = vmatpush.msra.mxu0 %v451
    %529 = vmatmul.f32.gmra.mxu0 %v417
    %v530 = vpop.f32.mrf.mxu0
    %v531 = vadd.f32 %v508, %v530
    %532 = vmatmul.f32.gmra.mxu0 %v418
    %v533 = vpop.f32.mrf.mxu0
    %v534 = vadd.f32 %v511, %v533
    %535 = vdwg.mxu0
    %536 = vmatpush.msra.mxu0 %v450
    %537 = vmatpush.msra.mxu0 %v448
    %538 = vmatpush.msra.mxu0 %v446
    %539 = vmatpush.msra.mxu0 %v444
    %540 = vmatpush.msra.mxu0 %v442
    %541 = vmatpush.msra.mxu0 %v440
    %542 = vmatpush.msra.mxu0 %v438
    %543 = vmatpush.msra.mxu0 %v436
    %544 = vmatpush.msra.mxu0 %v434
    %545 = vmatpush.msra.mxu0 %v432
    %546 = vmatpush.msra.mxu0 %v430
    %547 = vmatpush.msra.mxu0 %v428
    %548 = vmatpush.msra.mxu0 %v426
    %549 = vmatpush.msra.mxu0 %v424
    %550 = vmatpush.msra.mxu0 %v422
    %551 = vmatpush.msra.mxu0 %v420
    %552 = vmatmul.f32.gmra.mxu0 %v408
    %v553 = vpop.f32.mrf.mxu0
    %v554 = vadd.f32 %v487, %v553
    %555 = vmatmul.f32.gmra.mxu0 %v411
    %v556 = vpop.f32.mrf.mxu0
    %v557 = vadd.f32 %v487, %v556
    %558 = vdwg.mxu0
    %559 = vmatpush.msra.mxu0 %v482
    %560 = vmatpush.msra.mxu0 %v480
    %561 = vmatpush.msra.mxu0 %v478
    %562 = vmatpush.msra.mxu0 %v476
    %563 = vmatpush.msra.mxu0 %v474
    %564 = vmatpush.msra.mxu0 %v472
    %565 = vmatpush.msra.mxu0 %v470
    %566 = vmatpush.msra.mxu0 %v468
    %567 = vmatpush.msra.mxu0 %v466
    %568 = vmatpush.msra.mxu0 %v464
    %569 = vmatpush.msra.mxu0 %v462
    %570 = vmatpush.msra.mxu0 %v460
    %571 = vmatpush.msra.mxu0 %v458
    %572 = vmatpush.msra.mxu0 %v456
    %573 = vmatpush.msra.mxu0 %v454
    %574 = vmatpush.msra.mxu0 %v452
    %575 = vmatmul.f32.gmra.mxu0 %v417
    %v576 = vpop.f32.mrf.mxu0
    %v577 = vadd.f32 %v554, %v576
    %578 = vmatmul.f32.gmra.mxu0 %v418
    %v579 = vpop.f32.mrf.mxu0
    %v580 = vadd.f32 %v557, %v579
    %581 = vdwg.mxu0
    %582 = vst [vmem:[%s4] sm:$0xff] %v531
    %583 = vst [vmem:[%s4 + $0x8] sm:$0xff] %v577
    %584 = vst [vmem:[%s4 + $0x10] sm:$0xff] %v534
    %585 = vst [vmem:[%s4 + $0x18] sm:$0xff] %v580
    // Predicated region
    $region22: #{_lambda_.1} parent=1 // pred_check
      _
    $region23: #{_lambda_.1} parent=1 // pred_check_branch
      %587 = sbr.rel (0) target = $region25
    $region24: #{_lambda_.1} parent=1 // pred_region
      _
    $region25: #{_lambda_.1} parent=1 // pred_fallthru
      _
    // Predicated region
    $region26: #{_lambda_.1} parent=1 // pred_check
      _
    $region27: #{_lambda_.1} parent=1 // pred_check_branch
      %589 = sbr.rel (0) target = $region29
    $region28: #{_lambda_.1} parent=1 // pred_region
      _
    $region29: #{_lambda_.1} parent=1 // pred_fallthru
      _
    %590 = vsyncpa [#allocation4], 1

</llo_original>
